<compile_context>
chip_gen: v5e
topology: v5e:2x2
jax: 0.10.0
libtpu: 0.0.40
codegen_flags: <defaults>
</compile_context>

<pallas_src>
import jax
import jax.numpy as jnp
from jax import lax
from jax.experimental import pallas as pl
from jax.experimental.pallas import tpu as pltpu


def _round_up(x: int, m: int) -> int:
    return ((x + m - 1) // m) * m


def decoder_matmul_kernel(z_ref, w_ref, b_ref, x_ref):
    # z_ref: (tm, L) bf16, w_ref: (tn, L) bf16 (PyTorch layout; trans_b contraction),
    # b_ref: (1, tn) f32 lane-dense row, x_ref: (tm, tn) f32.
    x_ref[...] = (
        lax.dot_general(
            z_ref[...],
            w_ref[...],
            dimension_numbers=(((1,), (1,)), ((), ())),  # contract over L (trans_b)
            preferred_element_type=jnp.float32,
        )
        + b_ref[...]  # (1, tn) broadcast over batch rows
    )


def decoder_forward(z, W_netp, b_netp, loglam, logW, *, tm=256, tn=512):
    """z: (B, n_latent); W_netp: (n_input, n_latent); b_netp/logW: (n_input,); loglam: (1,)."""
    B, L = z.shape
    N = W_netp.shape[0]

    # z-independent activations: keep them out of the kernel hot path.
    lam = jnp.exp(loglam.astype(jnp.float32))
    W = jnp.exp(logW.astype(jnp.float32))
    # TODO(synk): act_nng_exp=False (softplus branch) not exercised; only the
    # default exp() activation path of the module is implemented.

    # bf16 MXU operands, f32 accumulate / output.
    z_bf = z.astype(jnp.bfloat16)
    w_bf = W_netp.astype(jnp.bfloat16)          # keep (N, L) layout — no transpose
    b_f32 = b_netp.astype(jnp.float32).reshape(1, N)

    # Tile sizes: adapt down for small inputs, keep bf16-legal (16 sublane / 128 lane).
    tm = min(tm, _round_up(B, 16))
    tn = min(tn, _round_up(N, 128))
    Bp = _round_up(B, tm)
    Np = _round_up(N, tn)
    if Bp != B:
        z_bf = jnp.pad(z_bf, ((0, Bp - B), (0, 0)))
    if Np != N:
        w_bf = jnp.pad(w_bf, ((0, Np - N), (0, 0)))
        b_f32 = jnp.pad(b_f32, ((0, 0), (0, Np - N)))

    grid = (Bp // tm, Np // tn)

    x_padded = pl.pallas_call(
        decoder_matmul_kernel,
        out_shape=jax.ShapeDtypeStruct((Bp, Np), jnp.float32),
        grid=grid,
        in_specs=[
            pl.BlockSpec((tm, L), lambda i, j: (i, 0)),   # z tile
            pl.BlockSpec((tn, L), lambda i, j: (j, 0)),   # weight tile (trans_b)
            pl.BlockSpec((1, tn), lambda i, j: (0, j)),   # bias tile
        ],
        out_specs=pl.BlockSpec((tm, tn), lambda i, j: (i, j)),
        compiler_params=pltpu.CompilerParams(
            dimension_semantics=("parallel", "parallel")),
    )(z_bf, w_bf, b_f32)

    x_tilde = x_padded[:B, :N] if (Bp != B or Np != N) else x_padded
    return x_tilde, lam, W


if __name__ == "__main__":
    n_input = 128
    n_latent = 32
    batch = 8

    key = jax.random.PRNGKey(0)
    k_z, k_loglam, k_logw, k_w, k_b = jax.random.split(key, 5)

    # Deterministic synthetic parameters mirroring Decoder.__init__
    loglam = jax.random.normal(k_loglam, (1,), dtype=jnp.float32)            # randn(1)
    logW = jax.random.normal(k_logw, (n_input,), dtype=jnp.float32)          # randn(n_input)
    W_netp = 0.01 * jax.random.normal(k_w, (n_input, n_latent), jnp.float32)
    b_netp = 0.01 * jax.random.normal(k_b, (n_input,), jnp.float32)

    z = jax.random.normal(k_z, (batch, n_latent), dtype=jnp.float32)

    x_tilde, lam, W = decoder_forward(z, W_netp, b_netp, loglam, logW)
    jax.block_until_ready((x_tilde, lam, W))

    # References: bf16-operand / f32-accumulate reference (matches kernel numerics)
    # plus a loose check against the full-f32 linear.
    x_ref_bf16 = (
        jnp.dot(z.astype(jnp.bfloat16), W_netp.astype(jnp.bfloat16).T,
                preferred_element_type=jnp.float32)
        + b_netp
    )
    x_ref_f32 = z @ W_netp.T + b_netp

    assert x_tilde.shape == (batch, n_input)
    assert lam.shape == (1,)
    assert W.shape == (n_input,)
    assert jnp.allclose(x_tilde, x_ref_bf16, atol=1e-4, rtol=1e-4)
    assert jnp.allclose(x_tilde, x_ref_f32, atol=5e-2, rtol=5e-2)
    assert jnp.allclose(lam, jnp.exp(loglam), atol=1e-6, rtol=1e-6)
    assert jnp.allclose(W, jnp.exp(logW), atol=1e-6, rtol=1e-6)

    print("KERNEL_OK")
</pallas_src>

<mosaic_0001>
module attributes {stable_mosaic.version = 11 : i64} {
  func.func @decoder_matmul_kernel(%arg0: i32, %arg1: i32, %arg2: memref<16x32xbf16, #tpu.memory_space<vmem>>, %arg3: memref<128x32xbf16, #tpu.memory_space<vmem>>, %arg4: memref<1x128xf32, #tpu.memory_space<vmem>>, %arg5: memref<16x128xf32, #tpu.memory_space<vmem>>) attributes {dimension_semantics = [#tpu.dimension_semantics<parallel>, #tpu.dimension_semantics<parallel>], iteration_bounds = array<i64: 1, 1>, scalar_prefetch = 0 : i64, scratch_operands = 0 : i64, tpu.core_type = #tpu.core_type<tc>, window_params = [{transform_indices = @transform_0, window_bounds = array<i64: 16, 32>}, {transform_indices = @transform_1, window_bounds = array<i64: 128, 32>}, {transform_indices = @transform_2, window_bounds = array<i64: 1, 128>}, {transform_indices = @transform_3, window_bounds = array<i64: 16, 128>}]} {
    %c0 = arith.constant 0 : index
    %c0_0 = arith.constant 0 : index
    %0 = vector.load %arg2[%c0, %c0_0] : memref<16x32xbf16, #tpu.memory_space<vmem>>, vector<16x32xbf16>
    %c0_1 = arith.constant 0 : index
    %c0_2 = arith.constant 0 : index
    %1 = vector.load %arg3[%c0_1, %c0_2] : memref<128x32xbf16, #tpu.memory_space<vmem>>, vector<128x32xbf16>
    %cst = arith.constant dense<0.000000e+00> : vector<16x128xf32>
    %2 = tpu.matmul %0, %1, %cst {dimension_numbers = #tpu.dot_dimension_numbers<[1], [1], [0], [0], [0, 0, 1, 0], [], []>} : vector<16x32xbf16>, vector<128x32xbf16>, vector<16x128xf32> -> vector<16x128xf32>
    %c0_3 = arith.constant 0 : index
    %c0_4 = arith.constant 0 : index
    %3 = vector.load %arg4[%c0_3, %c0_4] : memref<1x128xf32, #tpu.memory_space<vmem>>, vector<1x128xf32>
    %4 = vector.broadcast %3 : vector<1x128xf32> to vector<16x128xf32>
    %5 = arith.addf %2, %4 : vector<16x128xf32>
    %c0_5 = arith.constant 0 : index
    %c0_6 = arith.constant 0 : index
    %6 = vector.load %arg5[%c0_5, %c0_6] : memref<16x128xf32, #tpu.memory_space<vmem>>, vector<16x128xf32>
    tpu.vector_store %arg5[%c0_5, %c0_6], %5 {strides = array<i32>} : memref<16x128xf32, #tpu.memory_space<vmem>>, vector<16x128xf32>,
    return
  }
  func.func @transform_0(%arg0: i32, %arg1: i32) -> (i32, i32) {
    %c0_i32 = arith.constant 0 : i32
    %c0_i32_0 = arith.constant 0 : i32
    return %arg0, %c0_i32 : i32, i32
  }
  func.func @transform_1(%arg0: i32, %arg1: i32) -> (i32, i32) {
    %c0_i32 = arith.constant 0 : i32
    %c0_i32_0 = arith.constant 0 : i32
    return %arg1, %c0_i32 : i32, i32
  }
  func.func @transform_2(%arg0: i32, %arg1: i32) -> (i32, i32) {
    %c0_i32 = arith.constant 0 : i32
    %c0_i32_0 = arith.constant 0 : i32
    return %c0_i32, %arg1 : i32, i32
  }
  func.func @transform_3(%arg0: i32, %arg1: i32) -> (i32, i32) {
    %c0_i32 = arith.constant 0 : i32
    return %arg0, %arg1 : i32, i32
  }
}

</mosaic_0001>

<llo_original>
// kernel: tpu_custom_call.1
$region0: #{tpu_custom_call.1}
  #allocation0 [shape = 'u32[]', space=smem, size = 0x4, offset = 0x4, fixed_abs, tag = 'smem constant byte address 0x4 - core index']
  #allocation1 [shape = 'u32[72,128]{1,0:T(1,128)}', space=vmem, size = 0x9000, scoped, tag = 'internal scratch']
  %s0 = inlined_call_operand.vmem [shape: bf16[16,32], index: 0, kind: input, shape index: {}]
  %s1 = inlined_call_operand.vmem [shape: bf16[128,32], index: 1, kind: input, shape index: {}]
  %s2 = inlined_call_operand.vmem [shape: f32[1,128], index: 2, kind: input, shape index: {}]
  %s3 = inlined_call_operand.hbm [shape: f32[16,128], index: 3, kind: output, shape index: {}]
  %s4 = sld [smem:[#allocation0]]
  $region22: #{tpu_custom_call.1} parent=0
    _
  %s6 = ssub.s32 1, %s4
  %s7 = scalar_select 0, %s6, %s4
  $region1: #{tpu_custom_call.1} parent=0
    #allocation2 [shape = 'u8[8192]{0}', space=vmem, size = 0x2000, scoped, tag = 'output window, operand 0, single buffered']
    #allocation3 [shape = 's32[1]{0}', space=sflag, size = 0x4, scoped, tag = 'scoped memory for tpu_custom_call.1']
    %8 = vsyncpa [#allocation3], 0
    // Predicated region
    $region2: #{tpu_custom_call.1} parent=1 // pred_check
      _
    $region3: #{tpu_custom_call.1} parent=1 // pred_check_branch
      %10 = sbr.rel (0) target = $region5
    $region4: #{tpu_custom_call.1} parent=1 // pred_region
      _
    $region5: #{tpu_custom_call.1} parent=1 // pred_fallthru
      _
    // Predicated region
    $region6: #{tpu_custom_call.1} parent=1 // pred_check
      _
    $region7: #{tpu_custom_call.1} parent=1 // pred_check_branch
      %12 = sbr.rel (0) target = $region9
    $region8: #{tpu_custom_call.1} parent=1 // pred_region
      _
    $region9: #{tpu_custom_call.1} parent=1 // pred_fallthru
      _
    // Predicated region
    $region10: #{tpu_custom_call.1} parent=1 // pred_check
      _
    $region11: #{tpu_custom_call.1} parent=1 // pred_check_branch
      %14 = sbr.rel (0) target = $region13
    $region12: #{tpu_custom_call.1} parent=1 // pred_region
      _
    $region13: #{tpu_custom_call.1} parent=1 // pred_fallthru
      _
    %v15 = vld [vmem:[%s0] sm:$0xf]
    %v16 = vld [vmem:[%s0 + $0x4] sm:$0xf]
    %v17 = vld [vmem:[%s1] sm:$0xf]
    %v18 = vld [vmem:[%s1 + $0x4] sm:$0xf]
    %v19 = vld [vmem:[%s1 + $0x8] sm:$0xf]
    %v20 = vld [vmem:[%s1 + $0xc] sm:$0xf]
    %v21 = vld [vmem:[%s1 + $0x10] sm:$0xf]
    %v22 = vld [vmem:[%s1 + $0x14] sm:$0xf]
    %v23 = vld [vmem:[%s1 + $0x18] sm:$0xf]
    %v24 = vld [vmem:[%s1 + $0x1c] sm:$0xf]
    %v25 = vld [vmem:[%s1 + $0x20] sm:$0xf]
    %v26 = vld [vmem:[%s1 + $0x24] sm:$0xf]
    %v27 = vld [vmem:[%s1 + $0x28] sm:$0xf]
    %v28 = vld [vmem:[%s1 + $0x2c] sm:$0xf]
    %v29 = vld [vmem:[%s1 + $0x30] sm:$0xf]
    %v30 = vld [vmem:[%s1 + $0x34] sm:$0xf]
    %v31 = vld [vmem:[%s1 + $0x38] sm:$0xf]
    %v32 = vld [vmem:[%s1 + $0x3c] sm:$0xf]
    %v33 = vld [vmem:[%s2] sm:$0x1]
    %v35 = vperm.slane %v33, 0
    %v39 = vunpack.c.l.b16 %v15
    %v40 = vunpack.c.l.b16 %v16
    %v41 = vpack.c.b16 %v40, %v39
    %v58 = vunpack.c.l.b16 %v17
    %v59 = vunpack.c.l.b16 %v18
    %v60 = vunpack.c.l.b16 %v19
    %v61 = vunpack.c.l.b16 %v20
    %v62 = vunpack.c.l.b16 %v21
    %v63 = vunpack.c.l.b16 %v22
    %v64 = vunpack.c.l.b16 %v23
    %v65 = vunpack.c.l.b16 %v24
    %v66 = vunpack.c.l.b16 %v25
    %v67 = vunpack.c.l.b16 %v26
    %v68 = vunpack.c.l.b16 %v27
    %v69 = vunpack.c.l.b16 %v28
    %v70 = vunpack.c.l.b16 %v29
    %v71 = vunpack.c.l.b16 %v30
    %v72 = vunpack.c.l.b16 %v31
    %v73 = vunpack.c.l.b16 %v32
    %v74 = vpack.c.b16 %v59, %v58
    %v75 = vpack.c.b16 %v61, %v60
    %v76 = vpack.c.b16 %v63, %v62
    %v77 = vpack.c.b16 %v65, %v64
    %v78 = vpack.c.b16 %v67, %v66
    %v79 = vpack.c.b16 %v69, %v68
    %v80 = vpack.c.b16 %v71, %v70
    %v81 = vpack.c.b16 %v73, %v72
    %vm82 = vcmask 261120
    %v84 = vsel %vm82, %v41, 0
    %v87 = vsel %vm82, %v74, 0
    %v90 = vsel %vm82, %v75, 0
    %v93 = vsel %vm82, %v76, 0
    %v96 = vsel %vm82, %v77, 0
    %v99 = vsel %vm82, %v78, 0
    %v102 = vsel %vm82, %v79, 0
    %v105 = vsel %vm82, %v80, 0
    %v108 = vsel %vm82, %v81, 0
    %110 = vmatpush.bf16.xpose.msra.mxu0 %v108
    %111 = vmatpush.bf16.xpose.msra.mxu0 %v105
    %112 = vmatpush.bf16.xpose.msra.mxu0 %v102
    %113 = vmatpush.bf16.xpose.msra.mxu0 %v99
    %114 = vmatpush.bf16.xpose.msra.mxu0 %v96
    %115 = vmatpush.bf16.xpose.msra.mxu0 %v93
    %116 = vmatpush.bf16.xpose.msra.mxu0 %v90
    %117 = vmatpush.bf16.xpose.msra.mxu0 %v87
    %118 = vmatmul.bf16.gmra.mxu0 %v84
    %v119 = vpop.f32.mrf.mxu0
    %v120 = vadd.f32 %v35, %v119
    %v121 = vpop.f32.mrf.mxu0
    %v122 = vadd.f32 %v35, %v121
    %123 = vdwg.mxu0
    %124 = vst [vmem:[#allocation2] sm:$0xff] %v120
    %125 = vst [vmem:[#allocation2 + $0x8] sm:$0xff] %v122
    // Predicated region
    $region14: #{tpu_custom_call.1} parent=1 // pred_check
      _
    $region15: #{tpu_custom_call.1} parent=1 // pred_check_branch
      %127 = sbr.rel (0) target = $region17
    $region16: #{tpu_custom_call.1} parent=1 // pred_region
      %129 = vsyncadd [#allocation3], 0
      %s130 = sshll.u32 [#allocation2], 4
      %s131 = int_to_ptr.vmem [resolvable:$true] %s130
      %s132 = sshll.u32 %s3, 4
      %s133 = int_to_ptr.hbm [resolvable:$true] %s132
      %138 = dma.vmem_to_hbm [thread:$0]  %s131, 256, %s133, [#allocation3], 128, 128, 8
    $region17: #{tpu_custom_call.1} parent=1 // pred_fallthru
      _
    // Predicated region
    $region18: #{tpu_custom_call.1} parent=1 // pred_check
      _
    $region19: #{tpu_custom_call.1} parent=1 // pred_check_branch
      %140 = sbr.rel (0) target = $region21
    $region20: #{tpu_custom_call.1} parent=1 // pred_region
      %142 = dma.done [#allocation3], 256
    $region21: #{tpu_custom_call.1} parent=1 // pred_fallthru
      _
    %143 = vsyncpa [#allocation3], 1

</llo_original>
